<compile_context>
chip_gen: v7x
topology: tpu7x:2x2x1
jax: 0.10.0
libtpu: 0.0.40
codegen_flags: <defaults>
</compile_context>

<pallas_src>
import functools

import jax
import jax.numpy as jnp
from jax.experimental import pallas as pl
from jax.experimental.pallas import tpu as pltpu


def _round_up(v, mult):
    return ((v + mult - 1) // mult) * mult


def _linear_kernel(x_ref, w_ref, o_ref, acc_ref):
    # x_ref: (TM, TK)  tile of flattened (batch*seq, in_features)
    # w_ref: (TK, TN)  tile of pre-transposed weight (in_features, out_features)
    # o_ref: (TM, TN)
    # acc_ref: (TM, TN) f32 accumulator, resident across the K grid axis
    k = pl.program_id(2)

    @pl.when(k == 0)
    def _():
        acc_ref[...] = jnp.zeros_like(acc_ref)

    acc_ref[...] += jnp.dot(
        x_ref[...], w_ref[...], preferred_element_type=jnp.float32
    )

    @pl.when(k == pl.num_programs(2) - 1)
    def _():
        o_ref[...] = acc_ref[...].astype(o_ref.dtype)


@functools.partial(
    jax.jit, static_argnames=("tile_m", "tile_n", "tile_k", "compute_dtype")
)
def fake_module_forward(
    x, weight, *, tile_m=256, tile_n=256, tile_k=512, compute_dtype=None
):
    """Pallas implementation of FakeModule.forward with func = F.linear(., weight).

    x:      (batch, seq, in_features)
    weight: (out_features, in_features)   (torch.nn.Linear layout)
    returns (batch, seq, out_features)
    """
    b, s, k = x.shape
    n, k_w = weight.shape
    assert k == k_w, "in_features mismatch"
    m = b * s

    orig_dtype = x.dtype
    if compute_dtype is not None:
        # bf16 on the MXU (f32 accumulation stays in the kernel scratch).
        x = x.astype(compute_dtype)
        weight = weight.astype(compute_dtype)

    # Effective tiles: shrink for small problems, stay (8, 128)-aligned.
    tm = min(tile_m, _round_up(m, 8))
    tn = min(tile_n, _round_up(n, 128))
    tk = min(tile_k, _round_up(k, 128))

    mp = _round_up(m, tm)
    npad = _round_up(n, tn)
    kp = _round_up(k, tk)

    # Flatten, pre-transpose the weight once to (K, N), zero-pad to tile grid.
    x2d = jnp.pad(x.reshape(m, k), ((0, mp - m), (0, kp - k)))
    w_kn = jnp.pad(weight.T, ((0, kp - k), (0, npad - n)))

    grid = (mp // tm, npad // tn, kp // tk)

    in_itemsize = jnp.dtype(x2d.dtype).itemsize
    out_itemsize = jnp.dtype(orig_dtype).itemsize

    cost = pl.CostEstimate(
        flops=2 * mp * npad * kp,
        transcendentals=0,
        bytes_accessed=(
            mp * kp * in_itemsize + kp * npad * in_itemsize + mp * npad * out_itemsize
        ),
    )

    # VMEM budget: double-buffered input tiles + double-buffered output tile
    # + f32 accumulator, with ~2x headroom, clamped to stay inside v7x's 64 MiB.
    vmem_need = (
        2 * (tm * tk + tk * tn) * in_itemsize
        + 2 * tm * tn * out_itemsize
        + tm * tn * 4
    )
    vmem_limit = int(min(max(2 * vmem_need, 16 * 1024 * 1024), 64 * 1024 * 1024))

    out2d = pl.pallas_call(
        _linear_kernel,
        out_shape=jax.ShapeDtypeStruct((mp, npad), orig_dtype),
        grid_spec=pltpu.PrefetchScalarGridSpec(
            num_scalar_prefetch=0,
            grid=grid,
            in_specs=[
                pl.BlockSpec((tm, tk), lambda i, j, kk: (i, kk)),  # x tile
                pl.BlockSpec((tk, tn), lambda i, j, kk: (kk, j)),  # weight tile
            ],
            out_specs=pl.BlockSpec((tm, tn), lambda i, j, kk: (i, j)),
            scratch_shapes=[pltpu.VMEM((tm, tn), jnp.float32)],
        ),
        compiler_params=pltpu.CompilerParams(
            dimension_semantics=("parallel", "parallel", "arbitrary"),
            vmem_limit_bytes=vmem_limit,
        ),
        cost_estimate=cost,
    )(x2d, w_kn)

    return out2d[:m, :n].reshape(b, s, n)


class FakeModuleJax:
    """Mirror of the torch FakeModule: holds `weight` and a `func`, forward=func(x)."""

    def __init__(self, weight, func):
        self.weight = weight
        self.func = func

    def __call__(self, x):
        return self.func(x)


if __name__ == "__main__":
    key = jax.random.PRNGKey(0)
    kx, kw = jax.random.split(key)

    batch, seq, hidden_in, hidden_out = 2, 8, 32, 64

    x = jax.random.normal(kx, (batch, seq, hidden_in), dtype=jnp.float32)
    weight = jax.random.normal(kw, (hidden_out, hidden_in), dtype=jnp.float32) * 0.02

    # Build FakeModule exactly like the torch version: store weight, store func,
    # forward just calls func(x). The func's hot path runs in the Pallas kernel.
    module = FakeModuleJax(weight, lambda inp: fake_module_forward(inp, weight))

    out = module(x)
    out = jax.block_until_ready(out)

    # Reference check (pure JAX) for the F.linear semantics.
    ref = jnp.einsum("bsk,nk->bsn", x, weight)
    assert out.shape == (batch, seq, hidden_out)
    assert jnp.allclose(out, ref, atol=1e-5, rtol=1e-5)

    # Optional bf16-on-MXU path (f32 accumulation); looser tolerance.
    out_bf16 = jax.block_until_ready(
        fake_module_forward(x, weight, compute_dtype=jnp.bfloat16)
    )
    assert out_bf16.shape == (batch, seq, hidden_out)
    assert jnp.allclose(out_bf16, ref, atol=5e-2, rtol=5e-2)

    print("KERNEL_OK")
</pallas_src>

<mosaic_0001>
module attributes {stable_mosaic.version = 11 : i64} {
  func.func @_linear_kernel(%arg0: i32, %arg1: i32, %arg2: i32, %arg3: memref<16x128xf32, #tpu.memory_space<vmem>>, %arg4: memref<128x128xf32, #tpu.memory_space<vmem>>, %arg5: memref<16x128xf32, #tpu.memory_space<vmem>>, %arg6: memref<16x128xf32, #tpu.memory_space<vmem>>) attributes {dimension_semantics = [#tpu.dimension_semantics<parallel>, #tpu.dimension_semantics<parallel>, #tpu.dimension_semantics<arbitrary>], iteration_bounds = array<i64: 1, 1, 1>, scalar_prefetch = 0 : i64, scratch_operands = 1 : i64, tpu.core_type = #tpu.core_type<tc>, window_params = [{transform_indices = @transform_0, window_bounds = array<i64: 16, 128>}, {transform_indices = @transform_1, window_bounds = array<i64: 128, 128>}, {transform_indices = @transform_2, window_bounds = array<i64: 16, 128>}]} {
    %c0_i32 = arith.constant 0 : i32
    %0 = arith.cmpi eq, %arg2, %c0_i32 : i32
    %1 = arith.extui %0 : i1 to i32
    %c0_i32_0 = arith.constant 0 : i32
    %2 = arith.cmpi ne, %1, %c0_i32_0 : i32
    scf.if %2 {
      %cst_10 = arith.constant 0.000000e+00 : f32
      %12 = vector.broadcast %cst_10 : f32 to vector<16x128xf32>
      %c0_11 = arith.constant 0 : index
      %c0_12 = arith.constant 0 : index
      %13 = vector.load %arg6[%c0_11, %c0_12] : memref<16x128xf32, #tpu.memory_space<vmem>>, vector<16x128xf32>
      tpu.vector_store %arg6[%c0_11, %c0_12], %12 {strides = array<i32>} : memref<16x128xf32, #tpu.memory_space<vmem>>, vector<16x128xf32>,
    } else {
    }
    %c0 = arith.constant 0 : index
    %c0_1 = arith.constant 0 : index
    %3 = vector.load %arg6[%c0, %c0_1] : memref<16x128xf32, #tpu.memory_space<vmem>>, vector<16x128xf32>
    %c0_2 = arith.constant 0 : index
    %c0_3 = arith.constant 0 : index
    %4 = vector.load %arg3[%c0_2, %c0_3] : memref<16x128xf32, #tpu.memory_space<vmem>>, vector<16x128xf32>
    %c0_4 = arith.constant 0 : index
    %c0_5 = arith.constant 0 : index
    %5 = vector.load %arg4[%c0_4, %c0_5] : memref<128x128xf32, #tpu.memory_space<vmem>>, vector<128x128xf32>
    %cst = arith.constant dense<0.000000e+00> : vector<16x128xf32>
    %6 = tpu.matmul %4, %5, %cst {dimension_numbers = #tpu.dot_dimension_numbers<[1], [0], [0], [1], [0, 0, 1, 1], [], []>} : vector<16x128xf32>, vector<128x128xf32>, vector<16x128xf32> -> vector<16x128xf32>
    %7 = arith.addf %3, %6 : vector<16x128xf32>
    %c0_6 = arith.constant 0 : index
    %c0_7 = arith.constant 0 : index
    %8 = vector.load %arg6[%c0_6, %c0_7] : memref<16x128xf32, #tpu.memory_space<vmem>>, vector<16x128xf32>
    tpu.vector_store %arg6[%c0_6, %c0_7], %7 {strides = array<i32>} : memref<16x128xf32, #tpu.memory_space<vmem>>, vector<16x128xf32>,
    %c0_i32_8 = arith.constant 0 : i32
    %9 = arith.cmpi eq, %arg2, %c0_i32_8 : i32
    %10 = arith.extui %9 : i1 to i32
    %c0_i32_9 = arith.constant 0 : i32
    %11 = arith.cmpi ne, %10, %c0_i32_9 : i32
    scf.if %11 {
      %c0_10 = arith.constant 0 : index
      %c0_11 = arith.constant 0 : index
      %12 = vector.load %arg6[%c0_10, %c0_11] : memref<16x128xf32, #tpu.memory_space<vmem>>, vector<16x128xf32>
      %c0_12 = arith.constant 0 : index
      %c0_13 = arith.constant 0 : index
      %13 = vector.load %arg5[%c0_12, %c0_13] : memref<16x128xf32, #tpu.memory_space<vmem>>, vector<16x128xf32>
      tpu.vector_store %arg5[%c0_12, %c0_13], %12 {strides = array<i32>} : memref<16x128xf32, #tpu.memory_space<vmem>>, vector<16x128xf32>,
    } else {
    }
    return
  }
  func.func @transform_0(%arg0: i32, %arg1: i32, %arg2: i32) -> (i32, i32) {
    %c0_i32 = arith.constant 0 : i32
    return %arg0, %arg2 : i32, i32
  }
  func.func @transform_1(%arg0: i32, %arg1: i32, %arg2: i32) -> (i32, i32) {
    %c0_i32 = arith.constant 0 : i32
    return %arg2, %arg1 : i32, i32
  }
  func.func @transform_2(%arg0: i32, %arg1: i32, %arg2: i32) -> (i32, i32) {
    %c0_i32 = arith.constant 0 : i32
    return %arg0, %arg1 : i32, i32
  }
}

</mosaic_0001>

<llo_original>
// kernel: fake_module_forward.1
$region0: #{fake_module_forward.1}
  #allocation0 [shape = 'u32[]', space=smem, size = 0x4, offset = 0x4, fixed_abs, tag = 'smem constant byte address 0x4 - core index']
  #allocation1 [shape = 'u32[144,128]{1,0:T(1,128)}', space=vmem, size = 0x12000, scoped, tag = 'internal scratch']
  #allocation2 [shape = 'f32[16,128]{1,0:T(8,128)}', space=vmem, size = 0x2000, scoped, tag = 'scratch operand']
  %s0 = inlined_call_operand.vmem [shape: f32[16,128], index: 0, kind: input, shape index: {}]
  %s1 = inlined_call_operand.vmem [shape: f32[128,128], index: 1, kind: input, shape index: {}]
  %s2 = inlined_call_operand.vmem [shape: f32[16,128], index: 2, kind: output, shape index: {}]
  %s3 = sld [smem:[#allocation0]]
  $region26: #{fake_module_forward.1} parent=0
    _
  %s5 = ssub.s32 1, %s3
  %s6 = scalar_select 0, %s5, %s3
  // Predicated region
  $region2: #{fake_module_forward.1} parent=0 // pred_check
    _
  $region3: #{fake_module_forward.1} parent=0 // pred_check_branch
    %8 = sbr.rel (0) target = $region5
  $region4: #{fake_module_forward.1} parent=0 // pred_region
    _
  $region5: #{fake_module_forward.1} parent=0 // pred_fallthru
    _
  // Predicated region
  $region6: #{fake_module_forward.1} parent=0 // pred_check
    _
  $region7: #{fake_module_forward.1} parent=0 // pred_check_branch
    %10 = sbr.rel (0) target = $region9
  $region8: #{fake_module_forward.1} parent=0 // pred_region
    _
  $region9: #{fake_module_forward.1} parent=0 // pred_fallthru
    _
  %p11 = scmp.eq.s32.totalorder 0, 0
  // Predicated region
  $region10: #{fake_module_forward.1} parent=0 // pred_check
    %p12 = pneg %p11
  $region11: #{fake_module_forward.1} parent=0 // pred_check_branch
    %14 = sbr.rel (%p12) target = $region13
  $region12: #{fake_module_forward.1} parent=0 // pred_region
    %15 = vst [vmem:[#allocation2] sm:$0xff] 0.0
    %16 = vst [vmem:[#allocation2 + $0x8] sm:$0xff] 0.0
  $region13: #{fake_module_forward.1} parent=0 // pred_fallthru
    _
  %v17 = vld [vmem:[#allocation2] sm:$0xff]
  %v18 = vld [vmem:[#allocation2 + $0x8] sm:$0xff]
  %v19 = vld [vmem:[%s0] sm:$0xff]
  %v20 = vld [vmem:[%s0 + $0x8] sm:$0xff]
  %v21 = vld [vmem:[%s1] sm:$0xff]
  %v22 = vld [vmem:[%s1 + $0x8] sm:$0xff]
  %v23 = vld [vmem:[%s1 + $0x10] sm:$0xff]
  %v24 = vld [vmem:[%s1 + $0x18] sm:$0xff]
  %v25 = vld [vmem:[%s1 + $0x20] sm:$0xff]
  %v26 = vld [vmem:[%s1 + $0x28] sm:$0xff]
  %v27 = vld [vmem:[%s1 + $0x30] sm:$0xff]
  %v28 = vld [vmem:[%s1 + $0x38] sm:$0xff]
  %v29 = vld [vmem:[%s1 + $0x40] sm:$0xff]
  %v30 = vld [vmem:[%s1 + $0x48] sm:$0xff]
  %v31 = vld [vmem:[%s1 + $0x50] sm:$0xff]
  %v32 = vld [vmem:[%s1 + $0x58] sm:$0xff]
  %v33 = vld [vmem:[%s1 + $0x60] sm:$0xff]
  %v34 = vld [vmem:[%s1 + $0x68] sm:$0xff]
  %v35 = vld [vmem:[%s1 + $0x70] sm:$0xff]
  %v36 = vld [vmem:[%s1 + $0x78] sm:$0xff]
  %37 = vmatprep.subr.mxu0 0.0
  %38 = vmatpush1.msra.mxu0 %v21
  %39 = vmatprep.subr.mxu0 0.0
  %40 = vmatpush1.msra.mxu0 %v22
  %41 = vmatprep.subr.mxu0 0.0
  %42 = vmatpush1.msra.mxu0 %v23
  %43 = vmatprep.subr.mxu0 0.0
  %44 = vmatpush1.msra.mxu0 %v24
  %45 = vmatprep.subr.mxu0 0.0
  %46 = vmatpush1.msra.mxu0 %v25
  %47 = vmatprep.subr.mxu0 0.0
  %48 = vmatpush1.msra.mxu0 %v26
  %49 = vmatprep.subr.mxu0 0.0
  %50 = vmatpush1.msra.mxu0 %v27
  %51 = vmatprep.subr.mxu0 0.0
  %52 = vmatpush1.msra.mxu0 %v28
  %53 = vmatprep.subr.mxu0 0.0
  %54 = vmatpush1.msra.mxu0 %v29
  %55 = vmatprep.subr.mxu0 0.0
  %56 = vmatpush1.msra.mxu0 %v30
  %57 = vmatprep.subr.mxu0 0.0
  %58 = vmatpush1.msra.mxu0 %v31
  %59 = vmatprep.subr.mxu0 0.0
  %60 = vmatpush1.msra.mxu0 %v32
  %61 = vmatprep.subr.mxu0 0.0
  %62 = vmatpush1.msra.mxu0 %v33
  %63 = vmatprep.subr.mxu0 0.0
  %64 = vmatpush1.msra.mxu0 %v34
  %65 = vmatprep.subr.mxu0 0.0
  %66 = vmatpush1.msra.mxu0 %v35
  %67 = vmatprep.subr.mxu0 0.0
  %68 = vmatpush1.msra.mxu0 %v36
  %69 = vmatprep.subr.mxu0 0.0
  %70 = vmatpush1.msra.mxu0 0.0
  %71 = vmatprep.subr.mxu0 0.0
  %72 = vmatpush1.msra.mxu0 0.0
  %73 = vmatprep.subr.mxu0 0.0
  %74 = vmatpush1.msra.mxu0 0.0
  %75 = vmatprep.subr.mxu0 0.0
  %76 = vmatpush1.msra.mxu0 0.0
  %77 = vmatprep.subr.mxu0 0.0
  %78 = vmatpush1.msra.mxu0 0.0
  %79 = vmatprep.subr.mxu0 0.0
  %80 = vmatpush1.msra.mxu0 0.0
  %81 = vmatprep.subr.mxu0 0.0
  %82 = vmatpush1.msra.mxu0 0.0
  %83 = vmatprep.subr.mxu0 0.0
  %84 = vmatpush1.msra.mxu0 0.0
  %85 = vmatprep.subr.mxu0 0.0
  %86 = vmatpush1.msra.mxu0 0.0
  %87 = vmatprep.subr.mxu0 0.0
  %88 = vmatpush1.msra.mxu0 0.0
  %89 = vmatprep.subr.mxu0 0.0
  %90 = vmatpush1.msra.mxu0 0.0
  %91 = vmatprep.subr.mxu0 0.0
  %92 = vmatpush1.msra.mxu0 0.0
  %93 = vmatprep.subr.mxu0 0.0
  %94 = vmatpush1.msra.mxu0 0.0
  %95 = vmatprep.subr.mxu0 0.0
  %96 = vmatpush1.msra.mxu0 0.0
  %97 = vmatprep.subr.mxu0 0.0
  %98 = vmatpush1.msra.mxu0 0.0
  %99 = vmatprep.subr.mxu0 0.0
  %100 = vmatpush1.msra.mxu0 0.0
  %101 = vmatprep.mubr.f32.mxu0 0.0
  %102 = vmatmul.mubr.f32.gmra.mrb[0].mxu0 %v19
  %v103 = vpop.f32.mrb[0].mxu0
  %v104 = vadd.f32 0.0, %v103
  %v105 = vpop.f32.mrb[0].mxu0
  %106 = vmatprep.mubr.f32.mxu0 0.0
  %107 = vmatmul.mubr.f32.gmra.mrb[0].mxu0 %v20
  %v108 = vpop.f32.mrb[0].mxu0
  %v109 = vadd.f32 0.0, %v108
  %v110 = vpop.f32.mrb[0].mxu0
  %111 = vdwg.mxu0
  %v112 = vadd.f32 %v17, %v104
  %v113 = vadd.f32 %v18, %v109
  %114 = vst [vmem:[#allocation2] sm:$0xff] %v112
  %115 = vst [vmem:[#allocation2 + $0x8] sm:$0xff] %v113
  // Predicated region
  $region14: #{fake_module_forward.1} parent=0 // pred_check
    %p116 = pneg %p11
  $region15: #{fake_module_forward.1} parent=0 // pred_check_branch
    %118 = sbr.rel (%p116) target = $region17
  $region16: #{fake_module_forward.1} parent=0 // pred_region
    %v119 = vld [vmem:[#allocation2] sm:$0xff]
    %v120 = vld [vmem:[#allocation2 + $0x8] sm:$0xff]
    %121 = vst [vmem:[%s2] sm:$0xff] %v119
    %122 = vst [vmem:[%s2 + $0x8] sm:$0xff] %v120
  $region17: #{fake_module_forward.1} parent=0 // pred_fallthru
    _
  // Predicated region
  $region18: #{fake_module_forward.1} parent=0 // pred_check
    _
  $region19: #{fake_module_forward.1} parent=0 // pred_check_branch
    %124 = sbr.rel (0) target = $region21
  $region20: #{fake_module_forward.1} parent=0 // pred_region
    _
  $region21: #{fake_module_forward.1} parent=0 // pred_fallthru
    _
  // Predicated region
  $region22: #{fake_module_forward.1} parent=0 // pred_check
    _
  $region23: #{fake_module_forward.1} parent=0 // pred_check_branch
    %126 = sbr.rel (0) target = $region25
  $region24: #{fake_module_forward.1} parent=0 // pred_region
    _
  $region25: #{fake_module_forward.1} parent=0 // pred_fallthru
    _

</llo_original>
